<compile_context>
chip_gen: v7x
topology: tpu7x:2x2x1
jax: 0.10.0
libtpu: 0.0.40
codegen_flags: <defaults>
</compile_context>

<pallas_src>
import math
from functools import partial

import jax
import jax.numpy as jnp
from jax.experimental import pallas as pl
from jax.experimental.pallas import tpu as pltpu

LANE = 128
# ~4 MiB blocks: big enough to amortize the ~0.35 us/grid-step overhead and
# sit near the HBM roofline; 2 arrays x 2 buffers x 4 MiB = 16 MiB of VMEM,
# which fits every generation (v7x has 64 MiB physical VMEM per TC).
TARGET_BLOCK_BYTES = 4 * 1024 * 1024
# Explicit headroom over the default scoped limit, still below v7x physical.
VMEM_LIMIT_BYTES = 48 * 1024 * 1024


def _copy_kernel(x_ref, o_ref):
    # The "compute" of a view is just moving bytes; identity copy.
    o_ref[...] = x_ref[...]


def _resolve_shape(numel, shape):
    """Resolve a torch.view-style shape (may contain a single -1)."""
    shape = list(shape)
    if shape.count(-1) > 1:
        raise ValueError("only one dimension can be inferred")
    if -1 in shape:
        known = math.prod(d for d in shape if d != -1)
        if known == 0 or numel % known != 0:
            raise ValueError(f"cannot view {numel} elements as {tuple(shape)}")
        shape[shape.index(-1)] = numel // known
    if math.prod(shape) != numel:
        raise ValueError(f"cannot view {numel} elements as {tuple(shape)}")
    return tuple(shape)


@partial(jax.jit, static_argnames=("out_shape",))
def _view_materialize(x, out_shape):
    """Push the bytes through one Pallas copy, then apply the view as metadata.

    jit-ing the whole path keeps all reshapes / the final slice as pure
    metadata or fused ops, so the only full HBM pass is the Pallas memcpy
    (plus one pad pass only when numel is not a multiple of 128).
    """
    numel = x.size
    itemsize = jnp.dtype(x.dtype).itemsize
    # dtype-aware sublane packing: f32 -> 8 rows/vreg, bf16 -> 16, int8/fp8 -> 32.
    sub = max(8, 32 // max(1, itemsize))

    x_flat = x.reshape(-1)
    # Only pad when the element count is not lane-aligned; ragged *row* counts
    # are handled for free by Pallas partial-block masking (block rows stay a
    # multiple of `sub`, so the (8,128) BlockSpec rule is always satisfied).
    padded = pl.cdiv(numel, LANE) * LANE
    if padded != numel:
        x_flat = jnp.pad(x_flat, (0, padded - numel))
    rows = padded // LANE
    x2d = x_flat.reshape(rows, LANE)

    bytes_per_row = LANE * itemsize
    target_rows = max(sub, (TARGET_BLOCK_BYTES // bytes_per_row) // sub * sub)
    # Either the full row extent (exempt from the (8,128) rule) or a large
    # sublane-aligned tile; ragged last block handled via the cdiv grid.
    tile_rows = rows if rows <= target_rows else target_rows
    grid = (pl.cdiv(rows, tile_rows),)

    y2d = pl.pallas_call(
        _copy_kernel,
        out_shape=jax.ShapeDtypeStruct((rows, LANE), x2d.dtype),
        grid_spec=pltpu.PrefetchScalarGridSpec(
            num_scalar_prefetch=0,
            grid=grid,
            in_specs=[pl.BlockSpec((tile_rows, LANE), lambda i: (i, 0))],
            out_specs=pl.BlockSpec((tile_rows, LANE), lambda i: (i, 0)),
        ),
        compiler_params=pltpu.CompilerParams(
            dimension_semantics=("parallel",),
            vmem_limit_bytes=VMEM_LIMIT_BYTES,
        ),
        # Pure identity copy: allow XLA to alias/donate the input HBM buffer.
        input_output_aliases={0: 0},
        # Advertise this as a pure-bandwidth op to XLA's scheduler.
        cost_estimate=pl.CostEstimate(
            flops=0, transcendentals=0, bytes_accessed=2 * padded * itemsize),
    )(x2d)

    y_flat = y2d.reshape(-1)
    if padded != numel:
        y_flat = y_flat[:numel]
    # The actual "view": pure metadata reshape, no extra data movement.
    return y_flat.reshape(out_shape)


class View:
    """Pallas equivalent of the PyTorch View module (forward = input.view(*shape)).

    materialize=True pushes the bytes through the Pallas copy kernel (the
    benchmarked data path); materialize=False is the true zero-copy view
    (metadata-only reshape), matching torch .view semantics exactly.
    """

    def __init__(self, *shape, materialize=True):
        self.shape = shape
        self.materialize = materialize

    def __call__(self, x):
        numel = x.size
        out_shape = _resolve_shape(numel, self.shape)
        if not self.materialize or numel == 0:
            # Fast path: a view needs no data movement at all.
            return x.reshape(out_shape)
        return _view_materialize(x, out_shape)


if __name__ == "__main__":
    key = jax.random.PRNGKey(0)

    # NCHW-style input consistent with the module's typical use.
    x = jax.random.normal(key, (2, 4, 16, 16), dtype=jnp.float32)
    view = View(2, -1)
    y = jax.block_until_ready(view(x))
    ref = x.reshape(2, -1)
    assert y.shape == (2, 1024), y.shape
    assert y.dtype == x.dtype
    assert jnp.array_equal(y, ref), "Pallas view output mismatch"

    # Ragged / non-128-multiple case exercises the padded path.
    k2 = jax.random.PRNGKey(1)
    x2 = jax.random.normal(k2, (3, 5, 7), dtype=jnp.bfloat16)  # 105 elements
    y2 = jax.block_until_ready(View(-1)(x2))
    ref2 = x2.reshape(-1)
    assert y2.shape == (105,), y2.shape
    assert y2.dtype == x2.dtype
    assert jnp.array_equal(y2, ref2), "Pallas view (ragged) output mismatch"

    # Lane-aligned but sublane-ragged case (no pad, full-row single block).
    k3 = jax.random.PRNGKey(2)
    x3 = jax.random.normal(k3, (9, 128), dtype=jnp.bfloat16)  # rows=9, sub=16
    y3 = jax.block_until_ready(View(3, 3, 128)(x3))
    assert y3.shape == (3, 3, 128), y3.shape
    assert jnp.array_equal(y3, x3.reshape(3, 3, 128)), "Pallas view (sublane-ragged) mismatch"

    print("KERNEL_OK")
</pallas_src>

<mosaic_0001>
module attributes {stable_mosaic.version = 11 : i64} {
  func.func @_copy_kernel(%arg0: i32, %arg1: memref<16x128xf32, #tpu.memory_space<vmem>>, %arg2: memref<16x128xf32, #tpu.memory_space<vmem>>) attributes {dimension_semantics = [#tpu.dimension_semantics<parallel>], iteration_bounds = array<i64: 1>, scalar_prefetch = 0 : i64, scratch_operands = 0 : i64, tpu.core_type = #tpu.core_type<tc>, window_params = [{transform_indices = @transform_0, window_bounds = array<i64: 16, 128>}, {transform_indices = @transform_1, window_bounds = array<i64: 16, 128>}]} {
    %c0 = arith.constant 0 : index
    %c0_0 = arith.constant 0 : index
    %0 = vector.load %arg1[%c0, %c0_0] : memref<16x128xf32, #tpu.memory_space<vmem>>, vector<16x128xf32>
    %c0_1 = arith.constant 0 : index
    %c0_2 = arith.constant 0 : index
    %1 = vector.load %arg2[%c0_1, %c0_2] : memref<16x128xf32, #tpu.memory_space<vmem>>, vector<16x128xf32>
    tpu.vector_store %arg2[%c0_1, %c0_2], %0 {strides = array<i32>} : memref<16x128xf32, #tpu.memory_space<vmem>>, vector<16x128xf32>,
    return
  }
  func.func @transform_0(%arg0: i32) -> (i32, i32) {
    %c0_i32 = arith.constant 0 : i32
    %c0_i32_0 = arith.constant 0 : i32
    return %arg0, %c0_i32 : i32, i32
  }
  func.func @transform_1(%arg0: i32) -> (i32, i32) {
    %c0_i32 = arith.constant 0 : i32
    %c0_i32_0 = arith.constant 0 : i32
    return %arg0, %c0_i32 : i32, i32
  }
}

</mosaic_0001>

<llo_original>
// kernel: _view_materialize.1
$region0: #{_view_materialize.1}
  #allocation0 [shape = 'u32[]', space=smem, size = 0x4, offset = 0x4, fixed_abs, tag = 'smem constant byte address 0x4 - core index']
  #allocation1 [shape = 'u32[144,128]{1,0:T(1,128)}', space=vmem, size = 0x12000, scoped, tag = 'internal scratch']
  %s0 = inlined_call_operand.vmem [shape: f32[16,128], index: 0, kind: input, shape index: {}, may-alias: {0,1}]
  %s1 = inlined_call_operand.vmem [shape: f32[16,128], index: 1, kind: output, shape index: {}, may-alias: {0,1}]
  %s2 = sld [smem:[#allocation0]]
  $region14: #{_view_materialize.1} parent=0
    _
  %s4 = ssub.s32 1, %s2
  %s5 = scalar_select 0, %s4, %s2
  // Predicated region
  $region2: #{_view_materialize.1} parent=0 // pred_check
    _
  $region3: #{_view_materialize.1} parent=0 // pred_check_branch
    %7 = sbr.rel (0) target = $region5
  $region4: #{_view_materialize.1} parent=0 // pred_region
    _
  $region5: #{_view_materialize.1} parent=0 // pred_fallthru
    _
  %v8 = vld [vmem:[%s0] sm:$0xff]
  %v9 = vld [vmem:[%s0 + $0x8] sm:$0xff]
  %10 = vst [vmem:[%s1] sm:$0xff] %v8
  %11 = vst [vmem:[%s1 + $0x8] sm:$0xff] %v9
  // Predicated region
  $region6: #{_view_materialize.1} parent=0 // pred_check
    _
  $region7: #{_view_materialize.1} parent=0 // pred_check_branch
    %13 = sbr.rel (0) target = $region9
  $region8: #{_view_materialize.1} parent=0 // pred_region
    _
  $region9: #{_view_materialize.1} parent=0 // pred_fallthru
    _
  // Predicated region
  $region10: #{_view_materialize.1} parent=0 // pred_check
    _
  $region11: #{_view_materialize.1} parent=0 // pred_check_branch
    %15 = sbr.rel (0) target = $region13
  $region12: #{_view_materialize.1} parent=0 // pred_region
    _
  $region13: #{_view_materialize.1} parent=0 // pred_fallthru
    _

</llo_original>
